<compile_context>
chip_gen: v5e
topology: v5e:2x2
jax: 0.10.0
libtpu: 0.0.40
codegen_flags: <defaults>
</compile_context>

<pallas_src>
import random
import string

import jax
import jax.numpy as jnp
from jax.experimental import pallas as pl
from jax.experimental.pallas import tpu as pltpu

_LANE = 128
_TARGET_BLOCK_BYTES = 4 * 1024 * 1024   # ~4 MiB of payload per grid step.
_VMEM_LIMIT_BYTES = 48 * 1024 * 1024    # Safe on v5e/v6e (128 MiB) and v7x (64 MiB).


def _heaviside_kernel(x_ref, o_ref):
    # Elementwise hot path: out = (x > 0) cast to the output dtype.
    o_ref[...] = (x_ref[...] > 0).astype(o_ref.dtype)


def _round_up(v, m):
    return (v + m - 1) // m * m


def _choose_block_rows(rows, itemsize):
    """Dtype-aware block size with a balanced, even-count grid split.

    ~4 MiB per block (8192 rows f32, 16384 bf16, 32768 int8), rounded to a
    multiple of 32 rows. The step count is rounded up to an even number so the
    two v7x TensorCores see a balanced partition when the grid is sharded.
    """
    max_rows = max(32, (_TARGET_BLOCK_BYTES // (_LANE * itemsize)) // 32 * 32)
    min_steps = 2 if rows >= 64 else 1   # >=2 balanced steps when there is real work.
    steps = max(min_steps, 2 * (-(-rows // (2 * max_rows))))
    block_rows = _round_up(-(-rows // steps), 32)
    return block_rows


def conditioned_sg_forward(x):
    """Pallas implementation of ConditionedSG.forward: (x > 0).astype(x.dtype)."""
    orig_shape = x.shape
    dtype = x.dtype
    itemsize = jnp.dtype(dtype).itemsize

    flat = x.reshape(-1)
    n = flat.shape[0]

    if n < _LANE or n % _LANE != 0:
        # Tiny or non-lane-aligned inputs: a single fused XLA elementwise op is
        # 1 read + 1 write (optimal); any slice/pad/concat around a kernel call
        # would cost 2-3x the HBM traffic.
        return (x > 0).astype(dtype)

    rows = n // _LANE
    x2d = flat.reshape(rows, _LANE)

    block_rows = _choose_block_rows(rows, itemsize)
    grid = (pl.cdiv(rows, block_rows),)

    out2d = pl.pallas_call(
        _heaviside_kernel,
        out_shape=jax.ShapeDtypeStruct((rows, _LANE), dtype),
        grid=grid,
        in_specs=[pl.BlockSpec((block_rows, _LANE), lambda i: (i, 0))],
        out_specs=pl.BlockSpec((block_rows, _LANE), lambda i: (i, 0)),
        compiler_params=pltpu.CompilerParams(
            dimension_semantics=("parallel",),
            vmem_limit_bytes=_VMEM_LIMIT_BYTES,
        ),
        cost_estimate=pl.CostEstimate(
            flops=n,
            transcendentals=0,
            bytes_accessed=2 * n * itemsize,
        ),
    )(x2d)

    return out2d.reshape(orig_shape)


class ConditionedSGPallas:
    """JAX/Pallas port of ConditionedSG (forward semantics).

    The module has no trainable parameters; rule / curve configuration only
    matters for the (unimplemented) surrogate-gradient backward pass.
    """

    def __init__(self, rule="I", on_ingrad=False, forwback=False,
                 curve_name="dfastsigmoid", continuous=False,
                 normalized_curve=False, sgoutn=False, fanin=1, fanout=1):
        assert fanin == 1, "fanin is not supported yet"
        assert rule in ("IV", "I", "I_IV", "0"), f"Unknown rule: {rule}"
        assert curve_name in ("dfastsigmoid", "triangular", "rectangular"), (
            f"Unknown curve: {curve_name}"
        )
        self.rule = rule
        self.curve_name = curve_name
        self.normalized_curve = normalized_curve
        # Deterministic id (the torch module draws 5 random chars).
        rng = random.Random(0)
        characters = string.ascii_letters + string.digits
        self.id = "".join(rng.choice(characters) for _ in range(5))

    def __call__(self, x):
        return conditioned_sg_forward(x)


if __name__ == "__main__":
    key = jax.random.PRNGKey(0)
    module = ConditionedSGPallas(rule="I", curve_name="dfastsigmoid")

    # Main check: NCHW input as the torch module expects (lane-aligned -> kernel).
    x = jax.random.normal(key, (2, 4, 16, 16), dtype=jnp.float32)
    y = jax.block_until_ready(module(x))
    y_ref = (x > 0).astype(x.dtype)
    assert y.shape == x.shape and y.dtype == x.dtype
    assert bool(jnp.all(y == y_ref))

    # Larger lane-aligned input: exercises the multi-step balanced grid.
    k1, k2, k3 = jax.random.split(key, 3)
    x_big = jax.random.normal(k1, (8, 64, 32, 32), dtype=jnp.float32)
    y_big = jax.block_until_ready(module(x_big))
    assert bool(jnp.all(y_big == (x_big > 0).astype(x_big.dtype)))

    # Ragged (n % 128 != 0) path: fused XLA fallback, same semantics.
    x_ragged = jax.random.normal(k2, (2, 300), dtype=jnp.float32)
    y_ragged = jax.block_until_ready(module(x_ragged))
    assert bool(jnp.all(y_ragged == (x_ragged > 0).astype(x_ragged.dtype)))

    # bf16 path (sublane-packed dtype, dtype-aware block sizing).
    x_bf16 = jax.random.normal(k3, (2, 4, 16, 16), dtype=jnp.bfloat16)
    y_bf16 = jax.block_until_ready(module(x_bf16))
    assert y_bf16.dtype == jnp.bfloat16
    assert bool(jnp.all(y_bf16 == (x_bf16 > 0).astype(jnp.bfloat16)))

    print("KERNEL_OK")
</pallas_src>

<mosaic_0001>
module attributes {stable_mosaic.version = 11 : i64} {
  func.func @_heaviside_kernel(%arg0: i32, %arg1: memref<32x128xf32, #tpu.memory_space<vmem>>, %arg2: memref<32x128xf32, #tpu.memory_space<vmem>>) attributes {dimension_semantics = [#tpu.dimension_semantics<parallel>], iteration_bounds = array<i64: 1>, scalar_prefetch = 0 : i64, scratch_operands = 0 : i64, tpu.core_type = #tpu.core_type<tc>, window_params = [{transform_indices = @transform_0, window_bounds = array<i64: 32, 128>}, {transform_indices = @transform_1, window_bounds = array<i64: 32, 128>}]} {
    %c0 = arith.constant 0 : index
    %c0_0 = arith.constant 0 : index
    %0 = vector.load %arg1[%c0, %c0_0] : memref<32x128xf32, #tpu.memory_space<vmem>>, vector<32x128xf32>
    %cst = arith.constant 0.000000e+00 : f32
    %1 = vector.broadcast %cst : f32 to vector<32x128xf32>
    %2 = arith.cmpf ogt, %0, %1 : vector<32x128xf32>
    %3 = arith.extui %2 : vector<32x128xi1> to vector<32x128xi32>
    %4 = arith.sitofp %3 : vector<32x128xi32> to vector<32x128xf32>
    %c0_1 = arith.constant 0 : index
    %c0_2 = arith.constant 0 : index
    %5 = vector.load %arg2[%c0_1, %c0_2] : memref<32x128xf32, #tpu.memory_space<vmem>>, vector<32x128xf32>
    tpu.vector_store %arg2[%c0_1, %c0_2], %4 {strides = array<i32>} : memref<32x128xf32, #tpu.memory_space<vmem>>, vector<32x128xf32>,
    return
  }
  func.func @transform_0(%arg0: i32) -> (i32, i32) {
    %c0_i32 = arith.constant 0 : i32
    %c0_i32_0 = arith.constant 0 : i32
    return %arg0, %c0_i32 : i32, i32
  }
  func.func @transform_1(%arg0: i32) -> (i32, i32) {
    %c0_i32 = arith.constant 0 : i32
    %c0_i32_0 = arith.constant 0 : i32
    return %arg0, %c0_i32 : i32, i32
  }
}

</mosaic_0001>

<llo_original>
// kernel: tpu_custom_call.1
$region0: #{tpu_custom_call.1}
  #allocation0 [shape = 'u32[]', space=smem, size = 0x4, offset = 0x4, fixed_abs, tag = 'smem constant byte address 0x4 - core index']
  #allocation1 [shape = 'u32[72,128]{1,0:T(1,128)}', space=vmem, size = 0x9000, scoped, tag = 'internal scratch']
  %s0 = inlined_call_operand.hbm [shape: f32[16,128], index: 0, kind: input, shape index: {}]
  %s1 = inlined_call_operand.hbm [shape: f32[16,128], index: 1, kind: output, shape index: {}]
  %s2 = sld [smem:[#allocation0]]
  $region18: #{tpu_custom_call.1} parent=0
    _
  %s4 = ssub.s32 1, %s2
  %s5 = scalar_select 0, %s4, %s2
  $region1: #{tpu_custom_call.1} parent=0
    #allocation2 [shape = 'u8[16384]{0}', space=vmem, size = 0x4000, scoped, tag = 'input window, operand 0, single buffered']
    #allocation3 [shape = 's32[1]{0}', space=sflag, size = 0x4, scoped, tag = 'scoped memory for tpu_custom_call.1']
    #allocation4 [shape = 's32[1]{0}', space=sflag, size = 0x4, scoped, tag = 'scoped memory for tpu_custom_call.1']
    #allocation5 [shape = 'u8[16384]{0}', space=vmem, size = 0x4000, scoped, tag = 'output window, operand 0, single buffered']
    %6 = vsyncpa [#allocation3], 0
    %7 = vsyncpa [#allocation4], 0
    // Predicated region
    $region2: #{tpu_custom_call.1} parent=1 // pred_check
      _
    $region3: #{tpu_custom_call.1} parent=1 // pred_check_branch
      %9 = sbr.rel (0) target = $region5
    $region4: #{tpu_custom_call.1} parent=1 // pred_region
      %11 = vsyncadd [#allocation3], 256
      %s12 = sshll.u32 %s0, 4
      %s13 = int_to_ptr.hbm [resolvable:$true] %s12
      %s14 = sshll.u32 [#allocation2], 4
      %s15 = int_to_ptr.vmem [resolvable:$true] %s14
      %20 = dma.hbm_to_vmem [thread:$0]  %s13, 256, %s15, [#allocation3], 128, 128, 8
    $region5: #{tpu_custom_call.1} parent=1 // pred_fallthru
      _
    // Predicated region
    $region6: #{tpu_custom_call.1} parent=1 // pred_check
      _
    $region7: #{tpu_custom_call.1} parent=1 // pred_check_branch
      %22 = sbr.rel (0) target = $region9
    $region8: #{tpu_custom_call.1} parent=1 // pred_region
      %24 = dma.done [#allocation3], 512
    $region9: #{tpu_custom_call.1} parent=1 // pred_fallthru
      _
    %v25 = vld [vmem:[#allocation2] sm:$0xff]
    %v26 = vld [vmem:[#allocation2 + $0x8] sm:$0xff]
    %v27 = vld [vmem:[#allocation2 + $0x10] sm:$0xff]
    %v28 = vld [vmem:[#allocation2 + $0x18] sm:$0xff]
    %vm29 = vcmp.gt.f32.partialorder %v25, 0.0
    %vm30 = vcmp.gt.f32.partialorder %v26, 0.0
    %vm31 = vcmp.gt.f32.partialorder %v27, 0.0
    %vm32 = vcmp.gt.f32.partialorder %v28, 0.0
    %v33 = vsel %vm29, 1, 0
    %v34 = vsel %vm30, 1, 0
    %v35 = vsel %vm31, 1, 0
    %v36 = vsel %vm32, 1, 0
    %v37 = vcvt.s32.f32 %v33
    %v38 = vcvt.s32.f32 %v34
    %v39 = vcvt.s32.f32 %v35
    %v40 = vcvt.s32.f32 %v36
    %41 = vst [vmem:[#allocation5] sm:$0xff] %v37
    %42 = vst [vmem:[#allocation5 + $0x8] sm:$0xff] %v38
    %43 = vst [vmem:[#allocation5 + $0x10] sm:$0xff] %v39
    %44 = vst [vmem:[#allocation5 + $0x18] sm:$0xff] %v40
    // Predicated region
    $region10: #{tpu_custom_call.1} parent=1 // pred_check
      _
    $region11: #{tpu_custom_call.1} parent=1 // pred_check_branch
      %46 = sbr.rel (0) target = $region13
    $region12: #{tpu_custom_call.1} parent=1 // pred_region
      %48 = vsyncadd [#allocation4], 256
      %s49 = sshll.u32 [#allocation5], 4
      %s50 = int_to_ptr.vmem [resolvable:$true] %s49
      %s51 = sshll.u32 %s1, 4
      %s52 = int_to_ptr.hbm [resolvable:$true] %s51
      %57 = dma.vmem_to_hbm [thread:$0]  %s50, 256, %s52, [#allocation4], 128, 128, 8
    $region13: #{tpu_custom_call.1} parent=1 // pred_fallthru
      _
    // Predicated region
    $region14: #{tpu_custom_call.1} parent=1 // pred_check
      _
    $region15: #{tpu_custom_call.1} parent=1 // pred_check_branch
      %59 = sbr.rel (0) target = $region17
    $region16: #{tpu_custom_call.1} parent=1 // pred_region
      %61 = dma.done [#allocation4], 512
    $region17: #{tpu_custom_call.1} parent=1 // pred_fallthru
      _
    %62 = vsyncpa [#allocation3], 1
    %63 = vsyncpa [#allocation4], 1

</llo_original>
